<compile_context>
chip_gen: v7x
topology: tpu7x:2x2x1
jax: 0.10.0
libtpu: 0.0.40
codegen_flags: <defaults>
</compile_context>

<pallas_src>
import functools

import jax
import jax.numpy as jnp
from jax.experimental import pallas as pl
from jax.experimental.pallas import tpu as pltpu

_NEG_INF = -1e30
_HEAD_PAD = 128  # lane-dense fused-head width (multiple of 128)


def _round_up(x, m):
    return (x + m - 1) // m * m


def _ppo_fused_kernel(state_ref, p1_ref, p2_ref, out_ref, *, action_dim):
    # --- fc: Linear + ReLU (bias folded into p1; the extra output column of
    #     p1 produces the constant-1 column of x that applies the head biases
    #     in the next matmul). -------------------------------------------------
    x = jnp.maximum(
        jnp.dot(state_ref[...], p1_ref[...],
                preferred_element_type=jnp.float32),
        0.0)

    # --- fused actor+critic head: one lane-dense matmul ----------------------
    # columns [0, action_dim)      -> actor logits
    # column  action_dim           -> critic value
    # columns (action_dim, 128)    -> zero padding
    head = jnp.dot(x, p2_ref[...], preferred_element_type=jnp.float32)

    lane = jax.lax.broadcasted_iota(jnp.int32, head.shape, dimension=1)
    is_logit = lane < action_dim

    # Softmax over the actor columns only; value / padding columns masked out.
    logits = jnp.where(is_logit, head, _NEG_INF)
    m = jnp.max(logits, axis=-1, keepdims=True)
    e = jnp.exp(logits - m)
    denom = jnp.sum(e, axis=-1, keepdims=True)

    # EUP approximate reciprocal + one Newton step -> full f32 accuracy while
    # keeping the expensive part off the VALU critical path.
    r = pl.reciprocal(denom, approx=True)
    r = r * (2.0 - denom * r)
    probs = e * r

    # Single unmasked, lane-dense store: probs in the actor columns, raw head
    # (critic value / zero padding) elsewhere.
    out_ref[...] = jnp.where(is_logit, probs, head)


@functools.partial(jax.jit, static_argnames=("batch_tile",))
def ppo_forward(state, w1, b1, wa, ba, wc, bc, *, batch_tile=512):
    """PPO forward pass: returns (action_probs [B, A], state_value [B, 1])."""
    B, state_dim = state.shape
    hidden_dim = w1.shape[1]
    action_dim = wa.shape[1]
    assert action_dim + 1 <= _HEAD_PAD

    f32 = jnp.float32

    # ---- pack layer-1 params: (state_dim+1, hidden_dim+1) -------------------
    p1 = jnp.zeros((state_dim + 1, hidden_dim + 1), f32)
    p1 = p1.at[:state_dim, :hidden_dim].set(w1.astype(f32))
    p1 = p1.at[state_dim, :hidden_dim].set(b1.reshape(-1).astype(f32))
    p1 = p1.at[state_dim, hidden_dim].set(1.0)  # produces the ones column in x

    # ---- pack fused head params: (hidden_dim+1, 128) -------------------------
    p2 = jnp.zeros((hidden_dim + 1, _HEAD_PAD), f32)
    p2 = p2.at[:hidden_dim, :action_dim].set(wa.astype(f32))
    p2 = p2.at[:hidden_dim, action_dim].set(wc.reshape(-1).astype(f32))
    p2 = p2.at[hidden_dim, :action_dim].set(ba.reshape(-1).astype(f32))
    p2 = p2.at[hidden_dim, action_dim].set(bc.reshape(-1)[0].astype(f32))

    # ---- augment + pad the batch ---------------------------------------------
    # Append the ones column (drives the folded layer-1 bias), pad rows to a
    # multiple of the batch tile (>= 8 for f32 sublane alignment).
    batch_tile = max(8, _round_up(batch_tile, 8))
    tb = min(_round_up(B, 8), batch_tile)
    b_pad = _round_up(B, tb)
    state_aug = jnp.concatenate(
        [state.astype(f32), jnp.ones((B, 1), f32)], axis=1)
    state_aug = jnp.pad(state_aug, ((0, b_pad - B), (0, 0)))

    grid = (b_pad // tb,)
    out = pl.pallas_call(
        functools.partial(_ppo_fused_kernel, action_dim=action_dim),
        out_shape=jax.ShapeDtypeStruct((b_pad, _HEAD_PAD), f32),
        grid_spec=pltpu.PrefetchScalarGridSpec(
            num_scalar_prefetch=0,
            grid=grid,
            in_specs=[
                # batch-tiled activations
                pl.BlockSpec((tb, state_dim + 1), lambda i: (i, 0)),
                # packed weights: constant block index -> VMEM-resident
                pl.BlockSpec((state_dim + 1, hidden_dim + 1), lambda i: (0, 0)),
                pl.BlockSpec((hidden_dim + 1, _HEAD_PAD), lambda i: (0, 0)),
            ],
            out_specs=pl.BlockSpec((tb, _HEAD_PAD), lambda i: (i, 0)),
        ),
        compiler_params=pltpu.CompilerParams(
            dimension_semantics=("parallel",)),
    )(state_aug, p1, p2)

    # Cheap XLA slices to split the fused, padded output.
    action_probs = out[:B, :action_dim]
    state_value = out[:B, action_dim:action_dim + 1]
    return action_probs, state_value


def init_params(key, state_dim, hidden_dim, action_dim):
    """PyTorch-style init: U(-1/sqrt(fan_in), 1/sqrt(fan_in))."""
    ks = jax.random.split(key, 6)

    def lin(kw, kb, fan_in, fan_out):
        bound = 1.0 / jnp.sqrt(jnp.float32(fan_in))
        w = jax.random.uniform(kw, (fan_in, fan_out), jnp.float32, -bound, bound)
        b = jax.random.uniform(kb, (fan_out,), jnp.float32, -bound, bound)
        return w, b

    w1, b1 = lin(ks[0], ks[1], state_dim, hidden_dim)
    wa, ba = lin(ks[2], ks[3], hidden_dim, action_dim)
    wc, bc = lin(ks[4], ks[5], hidden_dim, 1)
    return w1, b1, wa, ba, wc, bc


if __name__ == "__main__":
    B, STATE_DIM, HIDDEN_DIM, ACTION_DIM = 2, 16, 32, 8

    key = jax.random.PRNGKey(0)
    k_state, k_params = jax.random.split(key)

    state = jax.random.normal(k_state, (B, STATE_DIM), dtype=jnp.float32)
    params = init_params(k_params, STATE_DIM, HIDDEN_DIM, ACTION_DIM)

    action_probs, state_value = ppo_forward(state, *params)
    jax.block_until_ready((action_probs, state_value))

    # Plain-JAX reference of the same math (exact f32, exact division).
    w1, b1, wa, ba, wc, bc = params
    x_ref = jnp.maximum(state @ w1 + b1, 0.0)
    probs_ref = jax.nn.softmax(x_ref @ wa + ba, axis=1)
    value_ref = x_ref @ wc + bc

    assert action_probs.shape == (B, ACTION_DIM)
    assert state_value.shape == (B, 1)
    assert jnp.allclose(action_probs, probs_ref, atol=1e-4, rtol=1e-4)
    assert jnp.allclose(jnp.sum(action_probs, axis=1), 1.0, atol=1e-4)
    assert jnp.allclose(state_value, value_ref, atol=1e-5, rtol=1e-5)

    print("KERNEL_OK")
</pallas_src>

<mosaic_0001>
module attributes {stable_mosaic.version = 11 : i64} {
  func.func @_ppo_fused_kernel(%arg0: i32, %arg1: memref<8x17xf32, #tpu.memory_space<vmem>>, %arg2: memref<17x33xf32, #tpu.memory_space<vmem>>, %arg3: memref<33x128xf32, #tpu.memory_space<vmem>>, %arg4: memref<8x128xf32, #tpu.memory_space<vmem>>) attributes {dimension_semantics = [#tpu.dimension_semantics<parallel>], iteration_bounds = array<i64: 1>, scalar_prefetch = 0 : i64, scratch_operands = 0 : i64, tpu.core_type = #tpu.core_type<tc>, window_params = [{transform_indices = @transform_0, window_bounds = array<i64: 8, 17>}, {pipeline_mode = #tpu.pipeline_mode<synchronous>, transform_indices = @transform_1, window_bounds = array<i64: 17, 33>}, {pipeline_mode = #tpu.pipeline_mode<synchronous>, transform_indices = @transform_2, window_bounds = array<i64: 33, 128>}, {transform_indices = @transform_3, window_bounds = array<i64: 8, 128>}]} {
    %c0 = arith.constant 0 : index
    %c0_0 = arith.constant 0 : index
    %0 = vector.load %arg1[%c0, %c0_0] : memref<8x17xf32, #tpu.memory_space<vmem>>, vector<8x17xf32>
    %c0_1 = arith.constant 0 : index
    %c0_2 = arith.constant 0 : index
    %1 = vector.load %arg2[%c0_1, %c0_2] : memref<17x33xf32, #tpu.memory_space<vmem>>, vector<17x33xf32>
    %cst = arith.constant dense<0.000000e+00> : vector<8x33xf32>
    %2 = tpu.matmul %0, %1, %cst {dimension_numbers = #tpu.dot_dimension_numbers<[1], [0], [0], [1], [0, 0, 1, 1], [], []>} : vector<8x17xf32>, vector<17x33xf32>, vector<8x33xf32> -> vector<8x33xf32>
    %cst_3 = arith.constant 0.000000e+00 : f32
    %3 = vector.broadcast %cst_3 : f32 to vector<8x33xf32>
    %4 = arith.maximumf %2, %3 : vector<8x33xf32>
    %c0_4 = arith.constant 0 : index
    %c0_5 = arith.constant 0 : index
    %5 = vector.load %arg3[%c0_4, %c0_5] : memref<33x128xf32, #tpu.memory_space<vmem>>, vector<33x128xf32>
    %cst_6 = arith.constant dense<0.000000e+00> : vector<8x128xf32>
    %6 = tpu.matmul %4, %5, %cst_6 {dimension_numbers = #tpu.dot_dimension_numbers<[1], [0], [0], [1], [0, 0, 1, 1], [], []>} : vector<8x33xf32>, vector<33x128xf32>, vector<8x128xf32> -> vector<8x128xf32>
    %7 = tpu.iota {dimensions = array<i32: 1>} : vector<8x128xi32>
    %c8_i32 = arith.constant 8 : i32
    %8 = vector.broadcast %c8_i32 : i32 to vector<8x128xi32>
    %9 = arith.cmpi slt, %7, %8 : vector<8x128xi32>
    %cst_7 = arith.constant -1.000000e+30 : f32
    %10 = vector.broadcast %cst_7 : f32 to vector<8x128xf32>
    %11 = arith.select %9, %6, %10 : vector<8x128xi1>, vector<8x128xf32>
    %cst_8 = arith.constant dense<0xFF800000> : vector<8xf32>
    %12 = vector.multi_reduction <maximumf>, %11, %cst_8 [1] : vector<8x128xf32> to vector<8xf32>
    %13 = vector.shape_cast %12 : vector<8xf32> to vector<8x1xf32>
    %14 = vector.broadcast %13 : vector<8x1xf32> to vector<8x128xf32>
    %15 = arith.subf %11, %14 : vector<8x128xf32>
    %16 = math.exp %15 : vector<8x128xf32>
    %cst_9 = arith.constant dense<0.000000e+00> : vector<8xf32>
    %17 = vector.multi_reduction <add>, %16, %cst_9 [1] : vector<8x128xf32> to vector<8xf32>
    %18 = vector.shape_cast %17 : vector<8xf32> to vector<8x1xf32>
    %19 = tpu.reciprocal %18 {approx = true} : vector<8x1xf32> -> vector<8x1xf32>
    %20 = arith.mulf %18, %19 : vector<8x1xf32>
    %cst_10 = arith.constant 2.000000e+00 : f32
    %21 = vector.broadcast %cst_10 : f32 to vector<8x1xf32>
    %22 = arith.subf %21, %20 : vector<8x1xf32>
    %23 = arith.mulf %19, %22 : vector<8x1xf32>
    %24 = vector.broadcast %23 : vector<8x1xf32> to vector<8x128xf32>
    %25 = arith.mulf %16, %24 : vector<8x128xf32>
    %26 = arith.select %9, %25, %6 : vector<8x128xi1>, vector<8x128xf32>
    %c0_11 = arith.constant 0 : index
    %c0_12 = arith.constant 0 : index
    %27 = vector.load %arg4[%c0_11, %c0_12] : memref<8x128xf32, #tpu.memory_space<vmem>>, vector<8x128xf32>
    tpu.vector_store %arg4[%c0_11, %c0_12], %26 {strides = array<i32>} : memref<8x128xf32, #tpu.memory_space<vmem>>, vector<8x128xf32>,
    return
  }
  func.func @transform_0(%arg0: i32) -> (i32, i32) {
    %c0_i32 = arith.constant 0 : i32
    %c0_i32_0 = arith.constant 0 : i32
    return %arg0, %c0_i32 : i32, i32
  }
  func.func @transform_1(%arg0: i32) -> (i32, i32) {
    %c0_i32 = arith.constant 0 : i32
    %c0_i32_0 = arith.constant 0 : i32
    %c0_i32_1 = arith.constant 0 : i32
    return %c0_i32, %c0_i32_0 : i32, i32
  }
  func.func @transform_2(%arg0: i32) -> (i32, i32) {
    %c0_i32 = arith.constant 0 : i32
    %c0_i32_0 = arith.constant 0 : i32
    %c0_i32_1 = arith.constant 0 : i32
    return %c0_i32, %c0_i32_0 : i32, i32
  }
  func.func @transform_3(%arg0: i32) -> (i32, i32) {
    %c0_i32 = arith.constant 0 : i32
    %c0_i32_0 = arith.constant 0 : i32
    return %arg0, %c0_i32 : i32, i32
  }
}

</mosaic_0001>

<llo_original>
// kernel: ppo_forward.1
$region0: #{ppo_forward.1}
  #allocation0 [shape = 'u32[]', space=smem, size = 0x4, offset = 0x4, fixed_abs, tag = 'smem constant byte address 0x4 - core index']
  #allocation1 [shape = 'u32[144,128]{1,0:T(1,128)}', space=vmem, size = 0x12000, scoped, tag = 'internal scratch']
  %s0 = inlined_call_operand.vmem [shape: f32[8,17], index: 0, kind: input, shape index: {}]
  %s1 = inlined_call_operand.vmem [shape: f32[17,33], index: 1, kind: input, shape index: {}]
  %s2 = inlined_call_operand.vmem [shape: f32[33,128], index: 2, kind: input, shape index: {}]
  %s3 = inlined_call_operand.vmem [shape: f32[8,128], index: 3, kind: output, shape index: {}]
  %s4 = sld [smem:[#allocation0]]
  $region22: #{ppo_forward.1} parent=0
    _
  %s6 = ssub.s32 1, %s4
  %s7 = scalar_select 0, %s6, %s4
  // Predicated region
  $region2: #{ppo_forward.1} parent=0 // pred_check
    _
  $region3: #{ppo_forward.1} parent=0 // pred_check_branch
    %9 = sbr.rel (0) target = $region5
  $region4: #{ppo_forward.1} parent=0 // pred_region
    _
  $region5: #{ppo_forward.1} parent=0 // pred_fallthru
    _
  // Predicated region
  $region6: #{ppo_forward.1} parent=0 // pred_check
    _
  $region7: #{ppo_forward.1} parent=0 // pred_check_branch
    %11 = sbr.rel (0) target = $region9
  $region8: #{ppo_forward.1} parent=0 // pred_region
    _
  $region9: #{ppo_forward.1} parent=0 // pred_fallthru
    _
  // Predicated region
  $region10: #{ppo_forward.1} parent=0 // pred_check
    _
  $region11: #{ppo_forward.1} parent=0 // pred_check_branch
    %13 = sbr.rel (0) target = $region13
  $region12: #{ppo_forward.1} parent=0 // pred_region
    _
  $region13: #{ppo_forward.1} parent=0 // pred_fallthru
    _
  %v14 = vld [vmem:[%s0] sm:$0xff]
  %v15 = vld [vmem:[%s1] sm:$0xff]
  %v16 = vld [vmem:[%s1 + $0x8] sm:$0xff]
  %v17 = vld [vmem:[%s1 + $0x10] sm:$0x1]
  %vm18 = vcmask 138240
  %v20 = vsel %vm18, %v14, 0
  %vm22 = vcmask 1040384
  %v24 = vsel %vm22, %v17, 0
  %26 = vmatprep.subr.mxu0 0.0
  %27 = vmatpush1.msra.mxu0 %v15
  %28 = vmatprep.subr.mxu0 0.0
  %29 = vmatpush1.msra.mxu0 %v16
  %30 = vmatprep.subr.mxu0 0.0
  %31 = vmatpush1.msra.mxu0 %v24
  %32 = vmatprep.subr.mxu0 0.0
  %33 = vmatpush1.msra.mxu0 0.0
  %34 = vmatprep.subr.mxu0 0.0
  %35 = vmatpush1.msra.mxu0 0.0
  %36 = vmatprep.subr.mxu0 0.0
  %37 = vmatpush1.msra.mxu0 0.0
  %38 = vmatprep.subr.mxu0 0.0
  %39 = vmatpush1.msra.mxu0 0.0
  %40 = vmatprep.subr.mxu0 0.0
  %41 = vmatpush1.msra.mxu0 0.0
  %42 = vmatprep.subr.mxu0 0.0
  %43 = vmatpush1.msra.mxu0 0.0
  %44 = vmatprep.subr.mxu0 0.0
  %45 = vmatpush1.msra.mxu0 0.0
  %46 = vmatprep.subr.mxu0 0.0
  %47 = vmatpush1.msra.mxu0 0.0
  %48 = vmatprep.subr.mxu0 0.0
  %49 = vmatpush1.msra.mxu0 0.0
  %50 = vmatprep.subr.mxu0 0.0
  %51 = vmatpush1.msra.mxu0 0.0
  %52 = vmatprep.subr.mxu0 0.0
  %53 = vmatpush1.msra.mxu0 0.0
  %54 = vmatprep.subr.mxu0 0.0
  %55 = vmatpush1.msra.mxu0 0.0
  %56 = vmatprep.subr.mxu0 0.0
  %57 = vmatpush1.msra.mxu0 0.0
  %58 = vmatprep.subr.mxu0 0.0
  %59 = vmatpush1.msra.mxu0 0.0
  %60 = vmatprep.subr.mxu0 0.0
  %61 = vmatpush1.msra.mxu0 0.0
  %62 = vmatprep.subr.mxu0 0.0
  %63 = vmatpush1.msra.mxu0 0.0
  %64 = vmatprep.subr.mxu0 0.0
  %65 = vmatpush1.msra.mxu0 0.0
  %66 = vmatprep.subr.mxu0 0.0
  %67 = vmatpush1.msra.mxu0 0.0
  %68 = vmatprep.subr.mxu0 0.0
  %69 = vmatpush1.msra.mxu0 0.0
  %70 = vmatprep.subr.mxu0 0.0
  %71 = vmatpush1.msra.mxu0 0.0
  %72 = vmatprep.subr.mxu0 0.0
  %73 = vmatpush1.msra.mxu0 0.0
  %74 = vmatprep.subr.mxu0 0.0
  %75 = vmatpush1.msra.mxu0 0.0
  %76 = vmatprep.subr.mxu0 0.0
  %77 = vmatpush1.msra.mxu0 0.0
  %78 = vmatprep.subr.mxu0 0.0
  %79 = vmatpush1.msra.mxu0 0.0
  %80 = vmatprep.subr.mxu0 0.0
  %81 = vmatpush1.msra.mxu0 0.0
  %82 = vmatprep.subr.mxu0 0.0
  %83 = vmatpush1.msra.mxu0 0.0
  %84 = vmatprep.subr.mxu0 0.0
  %85 = vmatpush1.msra.mxu0 0.0
  %86 = vmatprep.subr.mxu0 0.0
  %87 = vmatpush1.msra.mxu0 0.0
  %88 = vmatprep.subr.mxu0 0.0
  %89 = vmatpush1.msra.mxu0 0.0
  %90 = vmatprep.mubr.f32.mxu0 0.0
  %91 = vmatmul.mubr.f32.gmra.mrb[0].mxu0 %v20
  %v92 = vpop.f32.mrb[0].mxu0
  %v93 = vadd.f32 0.0, %v92
  %v94 = vpop.f32.mrb[0].mxu0
  %95 = vdwg.mxu0
  %v96 = vmax.f32 %v93, 0.0
  %v97 = vld [vmem:[%s2] sm:$0xff]
  %v98 = vld [vmem:[%s2 + $0x8] sm:$0xff]
  %v99 = vld [vmem:[%s2 + $0x10] sm:$0xff]
  %v100 = vld [vmem:[%s2 + $0x18] sm:$0xff]
  %v101 = vld [vmem:[%s2 + $0x20] sm:$0x1]
  %vm102 = vcmask 269312
  %v104 = vsel %vm102, %v96, 0
  %v107 = vsel %vm22, %v101, 0
  %109 = vmatprep.subr.mxu0 0.0
  %110 = vmatpush1.msra.mxu0 %v97
  %111 = vmatprep.subr.mxu0 0.0
  %112 = vmatpush1.msra.mxu0 %v98
  %113 = vmatprep.subr.mxu0 0.0
  %114 = vmatpush1.msra.mxu0 %v99
  %115 = vmatprep.subr.mxu0 0.0
  %116 = vmatpush1.msra.mxu0 %v100
  %117 = vmatprep.subr.mxu0 0.0
  %118 = vmatpush1.msra.mxu0 %v107
  %119 = vmatprep.subr.mxu0 0.0
  %120 = vmatpush1.msra.mxu0 0.0
  %121 = vmatprep.subr.mxu0 0.0
  %122 = vmatpush1.msra.mxu0 0.0
  %123 = vmatprep.subr.mxu0 0.0
  %124 = vmatpush1.msra.mxu0 0.0
  %125 = vmatprep.subr.mxu0 0.0
  %126 = vmatpush1.msra.mxu0 0.0
  %127 = vmatprep.subr.mxu0 0.0
  %128 = vmatpush1.msra.mxu0 0.0
  %129 = vmatprep.subr.mxu0 0.0
  %130 = vmatpush1.msra.mxu0 0.0
  %131 = vmatprep.subr.mxu0 0.0
  %132 = vmatpush1.msra.mxu0 0.0
  %133 = vmatprep.subr.mxu0 0.0
  %134 = vmatpush1.msra.mxu0 0.0
  %135 = vmatprep.subr.mxu0 0.0
  %136 = vmatpush1.msra.mxu0 0.0
  %137 = vmatprep.subr.mxu0 0.0
  %138 = vmatpush1.msra.mxu0 0.0
  %139 = vmatprep.subr.mxu0 0.0
  %140 = vmatpush1.msra.mxu0 0.0
  %141 = vmatprep.subr.mxu0 0.0
  %142 = vmatpush1.msra.mxu0 0.0
  %143 = vmatprep.subr.mxu0 0.0
  %144 = vmatpush1.msra.mxu0 0.0
  %145 = vmatprep.subr.mxu0 0.0
  %146 = vmatpush1.msra.mxu0 0.0
  %147 = vmatprep.subr.mxu0 0.0
  %148 = vmatpush1.msra.mxu0 0.0
  %149 = vmatprep.subr.mxu0 0.0
  %150 = vmatpush1.msra.mxu0 0.0
  %151 = vmatprep.subr.mxu0 0.0
  %152 = vmatpush1.msra.mxu0 0.0
  %153 = vmatprep.subr.mxu0 0.0
  %154 = vmatpush1.msra.mxu0 0.0
  %155 = vmatprep.subr.mxu0 0.0
  %156 = vmatpush1.msra.mxu0 0.0
  %157 = vmatprep.subr.mxu0 0.0
  %158 = vmatpush1.msra.mxu0 0.0
  %159 = vmatprep.subr.mxu0 0.0
  %160 = vmatpush1.msra.mxu0 0.0
  %161 = vmatprep.subr.mxu0 0.0
  %162 = vmatpush1.msra.mxu0 0.0
  %163 = vmatprep.subr.mxu0 0.0
  %164 = vmatpush1.msra.mxu0 0.0
  %165 = vmatprep.subr.mxu0 0.0
  %166 = vmatpush1.msra.mxu0 0.0
  %167 = vmatprep.subr.mxu0 0.0
  %168 = vmatpush1.msra.mxu0 0.0
  %169 = vmatprep.subr.mxu0 0.0
  %170 = vmatpush1.msra.mxu0 0.0
  %171 = vmatprep.subr.mxu0 0.0
  %172 = vmatpush1.msra.mxu0 0.0
  %173 = vmatprep.mubr.f32.mxu0 0.0
  %174 = vmatmul.mubr.f32.gmra.mrb[0].mxu0 %v104
  %v175 = vpop.f32.mrb[0].mxu0
  %v176 = vadd.f32 0.0, %v175
  %v177 = vpop.f32.mrb[0].mxu0
  %178 = vdwg.mxu0
  %v179 = vlaneseq
  %v180 = vand.u32 %v179, 127
  %vm181 = vcmp.lt.s32.totalorder %v180, 8
  %v182 = vsel %vm181, %v176, -1e+30
  %183 = vmax.xlane.f32.xlu0 %v182
  %v184 = vpop.xlane.xlu0 %183
  %v185 = vsub.f32 %v182, %v184
  %v186 = vmul.f32 %v185, 1.442695
  %v187 = vpow.pop %v186
  %188 = vadd.xlane.f32.xlu0 %v187
  %v189 = vpop.xlane.xlu0 %188
  %v190 = vrcp.pop %v189
  %v191 = vmul.f32 %v189, %v190
  %v192 = vsub.f32 2.0, %v191
  %v193 = vmul.f32 %v190, %v192
  %v194 = vmul.f32 %v187, %v193
  %v195 = vsel %vm181, %v194, %v176
  %196 = vst [vmem:[%s3] sm:$0xff] %v195
  // Predicated region
  $region14: #{ppo_forward.1} parent=0 // pred_check
    _
  $region15: #{ppo_forward.1} parent=0 // pred_check_branch
    %198 = sbr.rel (0) target = $region17
  $region16: #{ppo_forward.1} parent=0 // pred_region
    _
  $region17: #{ppo_forward.1} parent=0 // pred_fallthru
    _
  // Predicated region
  $region18: #{ppo_forward.1} parent=0 // pred_check
    _
  $region19: #{ppo_forward.1} parent=0 // pred_check_branch
    %200 = sbr.rel (0) target = $region21
  $region20: #{ppo_forward.1} parent=0 // pred_region
    _
  $region21: #{ppo_forward.1} parent=0 // pred_fallthru
    _

</llo_original>
